<compile_context>
chip_gen: v6e
topology: v6e:2x2x1
jax: 0.10.0
libtpu: 0.0.40
codegen_flags: <defaults>
</compile_context>

<pallas_src>
import functools
import math

import jax
import jax.numpy as jnp
from jax import lax
from jax.experimental import pallas as pl
from jax.experimental.pallas import tpu as pltpu

LN_EPS = 1e-12      # BERT LayerNorm epsilon
_LANE = 128         # TPU lane width: H and the padded adapter dim must be multiples
_SUBLANE = 16       # row-tile granularity that is safe for both f32 (8) and bf16 (16)


def _round_up(x, m):
    return ((x + m - 1) // m) * m


def _gelu_exact(x):
    # Exact (erf-based) GELU, matching torch.nn.GELU / allennlp "gelu".
    return 0.5 * x * (1.0 + lax.erf(x * (1.0 / math.sqrt(2.0))))


@functools.lru_cache(maxsize=None)
def _single_buffer_ok():
    """True iff `pipeline_mode=pl.Buffered(1)` block specs lower & run on this backend.
    Lazy (first call), cached, and forced to compile-time eval so it never stages into
    an enclosing trace."""
    if not hasattr(pl, "Buffered"):
        return False

    def _probe_kernel(x_ref, o_ref):
        o_ref[...] = x_ref[...] * 2.0

    try:
        with jax.ensure_compile_time_eval():
            spec = pl.BlockSpec((8, _LANE), lambda i: (0, 0), pipeline_mode=pl.Buffered(1))
            fn = pl.pallas_call(
                _probe_kernel,
                out_shape=jax.ShapeDtypeStruct((8, _LANE), jnp.float32),
                grid=(2,),
                in_specs=[spec],
                out_specs=pl.BlockSpec((8, _LANE), lambda i: (0, 0)),
            )
            jax.block_until_ready(fn(jnp.ones((8, _LANE), jnp.float32)))
        return True
    except Exception:
        return False


@functools.lru_cache(maxsize=None)
def _tpu_config():
    """Per-generation tile / VMEM-budget defaults, resolved lazily (never at import)."""
    try:
        kind = jax.devices()[0].device_kind.lower()
    except Exception:
        kind = ""
    is_v7 = ("v7" in kind) or ("7x" in kind)
    if is_v7:
        # v7x: 64 MiB VMEM per TensorCore (leave headroom), 2 TCs per chip.
        return dict(vmem_cap=56 << 20, default_tile=256, num_tc=2)
    # v5e / v6e: 128 MiB VMEM, 1 TC per chip.
    return dict(vmem_cap=100 << 20, default_tile=512, num_tc=1)


def _const_spec(shape, single_buffer):
    """BlockSpec for an operand whose block index is constant across the grid.
    Single-buffered when supported (no point double-buffering invariant weights)."""
    idx = lambda i: (0,) * len(shape)
    if single_buffer:
        return pl.BlockSpec(shape, idx, pipeline_mode=pl.Buffered(1))
    return pl.BlockSpec(shape, idx)


def adapter_bert_layer_kernel(
    x_ref,        # (TM, H)     hidden_states tile          [stream dtype]
    inp_ref,      # (TM, H)     input_tensor tile            [stream dtype]
    wdense_ref,   # (H, H)      dense weight^T               [matmul dtype]
    bdense_ref,   # (1, H)      f32
    wdown_ref,    # (H, A_pad)  adapter down weight^T        [matmul dtype]
    bdown_ref,    # (1, A_pad)  f32
    wup_ref,      # (A_pad, H)  adapter up weight^T          [matmul dtype]
    bup_ref,      # (1, H)      f32
    gamma_ref,    # (1, H)      f32  LayerNorm weight
    beta_ref,     # (1, H)      f32  LayerNorm bias
    out_ref,      # (TM, H)
):
    mm_dtype = wdense_ref.dtype  # MXU operand dtype (bf16 by default); accumulation is f32

    # base.dense on the MXU (f32 accumulation); bias add on the f32 VPU path.
    h = jnp.dot(x_ref[...].astype(mm_dtype), wdense_ref[...],
                preferred_element_type=jnp.float32)
    h = h + bdense_ref[...]
    # base.dropout -> identity in eval mode

    # adapter: down-proj -> exact GELU (f32) -> up-proj -> residual
    d = jnp.dot(h.astype(mm_dtype), wdown_ref[...], preferred_element_type=jnp.float32)
    d = _gelu_exact(d + bdown_ref[...])
    u = jnp.dot(d.astype(mm_dtype), wup_ref[...], preferred_element_type=jnp.float32)
    a = u + bup_ref[...] + h

    # base.LayerNorm(a + input_tensor): one-pass statistics, all f32 on the VPU.
    z = a + inp_ref[...].astype(jnp.float32)
    mean = jnp.mean(z, axis=-1, keepdims=True)
    mean_sq = jnp.mean(z * z, axis=-1, keepdims=True)
    var = jnp.maximum(mean_sq - mean * mean, 0.0)
    y = (z - mean) * lax.rsqrt(var + LN_EPS) * gamma_ref[...] + beta_ref[...]
    out_ref[...] = y.astype(out_ref.dtype)


def prepare_params(params, *, matmul_dtype=jnp.bfloat16):
    """One-time host-side prep (call once at init, NOT per forward step):
    transpose torch-style (out, in) weights to (in, out), pad the adapter dim to a
    multiple of 128 lanes, reshape vectors to (1, N), and store matmul weights in
    bf16 (default) for full-rate MXU on v5e/v6e/v7x."""
    H = params["w_dense"].shape[0]
    A = params["w_down"].shape[0]
    assert H % _LANE == 0, "hidden size must be a multiple of 128 lanes"
    A_pad = _round_up(A, _LANE)

    w_dense_t = params["w_dense"].T        # (H, H)  [in, out]
    w_down_t = params["w_down"].T          # (H, A)
    w_up_t = params["w_up"].T              # (A, H)
    b_down = params["b_down"]
    if A_pad != A:
        # Zero-padding the adapter dim is exact: padded d-columns are gelu(0) = 0
        # and the padded rows of W_up^T are zero, so they contribute nothing.
        w_down_t = jnp.pad(w_down_t, ((0, 0), (0, A_pad - A)))
        w_up_t = jnp.pad(w_up_t, ((0, A_pad - A), (0, 0)))
        b_down = jnp.pad(b_down, (0, A_pad - A))

    return dict(
        w_dense=w_dense_t.astype(matmul_dtype),
        b_dense=params["b_dense"].reshape(1, H).astype(jnp.float32),
        w_down=w_down_t.astype(matmul_dtype),
        b_down=b_down.reshape(1, A_pad).astype(jnp.float32),
        w_up=w_up_t.astype(matmul_dtype),
        b_up=params["b_up"].reshape(1, H).astype(jnp.float32),
        ln_gamma=params["ln_gamma"].reshape(1, H).astype(jnp.float32),
        ln_beta=params["ln_beta"].reshape(1, H).astype(jnp.float32),
    )


@functools.partial(
    jax.jit,
    static_argnames=("tile_rows", "stream_dtype", "out_dtype",
                     "single_buffer", "vmem_cap", "num_tc"),
)
def _adapter_bert_layer_impl(hidden_states, input_tensor, prepared, *,
                             tile_rows, stream_dtype, out_dtype,
                             single_buffer, vmem_cap, num_tc):
    B, S, H = hidden_states.shape
    assert H % _LANE == 0, "hidden size must be a multiple of 128 lanes"
    A_pad = prepared["w_down"].shape[1]
    R = B * S
    out_dt = jnp.dtype(hidden_states.dtype) if out_dtype is None else jnp.dtype(out_dtype)

    # --- choose the row tile ------------------------------------------------
    tm = max(_SUBLANE, min(_round_up(tile_rows, _SUBLANE), _round_up(R, _SUBLANE)))

    # v7x: make sure both TensorCores get at least one grid step each.
    while num_tc > 1 and (_round_up(R, tm) // tm) < num_tc and tm > _SUBLANE:
        tm = max(_SUBLANE, _round_up(tm // 2, _SUBLANE))

    act_in_bytes = jnp.dtype(stream_dtype).itemsize
    out_bytes = jnp.dtype(out_dt).itemsize
    w_bytes = jnp.dtype(prepared["w_dense"].dtype).itemsize
    wbuf = 1 if single_buffer else 2

    def vmem_est(t):
        return (
            2 * t * H * (2 * act_in_bytes + out_bytes)       # x / inp / out tiles, double-buffered
            + wbuf * (H * H + 2 * H * A_pad) * w_bytes       # resident weights
            + wbuf * (4 * H + A_pad) * 4                     # biases + LN params (f32)
            + t * (6 * H + 2 * A_pad) * 4                    # in-kernel f32 temporaries
        )

    # Shrink the row tile until the estimate fits the per-generation VMEM budget.
    while tm > _SUBLANE and vmem_est(tm) > vmem_cap:
        tm = max(_SUBLANE, _round_up(tm // 2, _SUBLANE))
    if vmem_est(tm) > vmem_cap:
        raise ValueError(
            "Resident weights do not fit the VMEM budget; store weights in bf16 "
            "(prepare_params(matmul_dtype=jnp.bfloat16)) or reduce the hidden size.")

    R_pad = _round_up(R, tm)

    # --- stream activations (bf16 by default) --------------------------------
    x2 = hidden_states.reshape(R, H).astype(stream_dtype)
    i2 = input_tensor.reshape(R, H).astype(stream_dtype)
    if R_pad != R:
        # Padded rows are independent under the per-row LayerNorm and are sliced
        # off below, so they never pollute real outputs (and produce no NaNs).
        x2 = jnp.pad(x2, ((0, R_pad - R), (0, 0)))
        i2 = jnp.pad(i2, ((0, R_pad - R), (0, 0)))

    vmem_limit = int(max(32 << 20, min(vmem_est(tm) + (8 << 20), vmem_cap)))

    out2 = pl.pallas_call(
        adapter_bert_layer_kernel,
        out_shape=jax.ShapeDtypeStruct((R_pad, H), out_dt),
        grid_spec=pltpu.PrefetchScalarGridSpec(
            num_scalar_prefetch=0,
            grid=(R_pad // tm,),
            in_specs=[
                pl.BlockSpec((tm, H), lambda i: (i, 0)),       # hidden_states tile
                pl.BlockSpec((tm, H), lambda i: (i, 0)),       # input_tensor tile
                _const_spec((H, H), single_buffer),            # dense W^T
                _const_spec((1, H), single_buffer),            # dense bias
                _const_spec((H, A_pad), single_buffer),        # adapter down W^T (lane-padded)
                _const_spec((1, A_pad), single_buffer),        # adapter down bias
                _const_spec((A_pad, H), single_buffer),        # adapter up W^T
                _const_spec((1, H), single_buffer),            # adapter up bias
                _const_spec((1, H), single_buffer),            # LN gamma
                _const_spec((1, H), single_buffer),            # LN beta
            ],
            out_specs=pl.BlockSpec((tm, H), lambda i: (i, 0)),
        ),
        compiler_params=pltpu.CompilerParams(
            # 1-D row grid; "parallel" lets it shard across v7x's two TensorCores.
            dimension_semantics=("parallel",),
            vmem_limit_bytes=vmem_limit,
        ),
    )(
        x2, i2,
        prepared["w_dense"], prepared["b_dense"],
        prepared["w_down"], prepared["b_down"],
        prepared["w_up"], prepared["b_up"],
        prepared["ln_gamma"], prepared["ln_beta"],
    )

    return out2[:R].reshape(B, S, H)


def adapter_bert_layer(hidden_states, input_tensor, prepared, *,
                       tile_rows=None, stream_dtype=jnp.bfloat16, out_dtype=None):
    """hidden_states, input_tensor: (B, S, H); prepared = prepare_params(params).
    Returns LayerNorm(adapter(dense(hidden_states)) + input_tensor), shape (B, S, H).
    By default: bf16 MXU weights, bf16-streamed activations, f32 accumulation/LN,
    output dtype = hidden_states.dtype (set out_dtype=jnp.bfloat16 to also halve
    the output stream)."""
    cfg = _tpu_config()
    single_buffer = _single_buffer_ok()     # lazy, cached; resolved OUTSIDE the jit trace
    tr = cfg["default_tile"] if tile_rows is None else int(tile_rows)
    return _adapter_bert_layer_impl(
        hidden_states, input_tensor, prepared,
        tile_rows=tr, stream_dtype=stream_dtype, out_dtype=out_dtype,
        single_buffer=single_buffer, vmem_cap=cfg["vmem_cap"], num_tc=cfg["num_tc"],
    )


def init_params(key, hidden, adapter_size):
    ks = jax.random.split(key, 4)
    # base.dense: Linear(hidden, hidden), torch-default-ish uniform init.
    bound = 1.0 / math.sqrt(hidden)
    w_dense = jax.random.uniform(ks[0], (hidden, hidden), jnp.float32, -bound, bound)
    b_dense = jax.random.uniform(ks[1], (hidden,), jnp.float32, -bound, bound)
    # Adapter: normal_(std=0.001) weights, zero biases.
    w_down = 0.001 * jax.random.normal(ks[2], (adapter_size, hidden), jnp.float32)
    w_up = 0.001 * jax.random.normal(ks[3], (hidden, adapter_size), jnp.float32)
    b_down = jnp.zeros((adapter_size,), jnp.float32)
    b_up = jnp.zeros((hidden,), jnp.float32)
    # LayerNorm: gamma=1, beta=0.
    ln_gamma = jnp.ones((hidden,), jnp.float32)
    ln_beta = jnp.zeros((hidden,), jnp.float32)
    return dict(
        w_dense=w_dense, b_dense=b_dense,
        w_down=w_down, b_down=b_down,
        w_up=w_up, b_up=b_up,
        ln_gamma=ln_gamma, ln_beta=ln_beta,
    )


def _reference(hidden_states, input_tensor, p):
    # Pure-JAX f32 reference of the same forward pass (two-pass LN, like PyTorch).
    h = hidden_states @ p["w_dense"].T + p["b_dense"]
    d = _gelu_exact(h @ p["w_down"].T + p["b_down"])
    u = d @ p["w_up"].T + p["b_up"]
    a = u + h
    z = a + input_tensor
    mean = jnp.mean(z, axis=-1, keepdims=True)
    var = jnp.mean((z - mean) ** 2, axis=-1, keepdims=True)
    zn = (z - mean) * lax.rsqrt(var + LN_EPS)
    return zn * p["ln_gamma"] + p["ln_beta"]


if __name__ == "__main__":
    H, A = 128, 64
    key = jax.random.PRNGKey(0)
    k1, k2, k3 = jax.random.split(key, 3)
    params = init_params(k3, H, A)

    # Odd seq length to exercise row padding (R = 18 -> padded row tile).
    B, S = 2, 9
    hidden_states = jax.random.normal(k1, (B, S, H), jnp.float32)
    input_tensor = jax.random.normal(k2, (B, S, H), jnp.float32)
    ref = _reference(hidden_states, input_tensor, params)

    # 1) Default fast path: bf16 MXU weights + bf16-streamed activations, f32 accum/LN.
    prep_bf16 = prepare_params(params)                       # bf16 weights by default
    out = jax.block_until_ready(adapter_bert_layer(hidden_states, input_tensor, prep_bf16))
    assert out.shape == (B, S, H) and out.dtype == hidden_states.dtype
    assert jnp.allclose(out, ref, atol=1e-1, rtol=1e-1), float(jnp.max(jnp.abs(out - ref)))

    # 2) Full-precision path: f32 weights + f32 streaming, tight tolerance
    #    (also validates the one-pass LayerNorm statistics against the two-pass reference).
    prep_f32 = prepare_params(params, matmul_dtype=jnp.float32)
    out_f32 = jax.block_until_ready(
        adapter_bert_layer(hidden_states, input_tensor, prep_f32, stream_dtype=jnp.float32))
    assert out_f32.shape == (B, S, H)
    assert jnp.allclose(out_f32, ref, atol=1e-4, rtol=1e-4), \
        float(jnp.max(jnp.abs(out_f32 - ref)))

    # 3) bf16 output stream (halves output HBM traffic as well).
    out_bf16 = jax.block_until_ready(
        adapter_bert_layer(hidden_states, input_tensor, prep_bf16, out_dtype=jnp.bfloat16))
    assert out_bf16.shape == (B, S, H) and out_bf16.dtype == jnp.bfloat16
    assert jnp.allclose(out_bf16.astype(jnp.float32), ref, atol=1.5e-1, rtol=1.5e-1), \
        float(jnp.max(jnp.abs(out_bf16.astype(jnp.float32) - ref)))

    print("KERNEL_OK")
</pallas_src>

<mosaic_0001>
module attributes {stable_mosaic.version = 11 : i64} {
  func.func @_probe_kernel(%arg0: i32, %arg1: memref<8x128xf32, #tpu.memory_space<vmem>>, %arg2: memref<8x128xf32, #tpu.memory_space<vmem>>) attributes {dimension_semantics = [#tpu.dimension_semantics<arbitrary>], iteration_bounds = array<i64: 2>, scalar_prefetch = 0 : i64, scratch_operands = 0 : i64, tpu.core_type = #tpu.core_type<tc>, window_params = [{pipeline_mode = #tpu.pipeline_mode<synchronous>, transform_indices = @transform_0, window_bounds = array<i64: 8, 128>}, {pipeline_mode = #tpu.pipeline_mode<synchronous>, transform_indices = @transform_1, window_bounds = array<i64: 8, 128>}]} {
    %c0 = arith.constant 0 : index
    %c0_0 = arith.constant 0 : index
    %0 = vector.load %arg1[%c0, %c0_0] : memref<8x128xf32, #tpu.memory_space<vmem>>, vector<8x128xf32>
    %cst = arith.constant 2.000000e+00 : f32
    %1 = vector.broadcast %cst : f32 to vector<8x128xf32>
    %2 = arith.mulf %0, %1 : vector<8x128xf32>
    %c0_1 = arith.constant 0 : index
    %c0_2 = arith.constant 0 : index
    %3 = vector.load %arg2[%c0_1, %c0_2] : memref<8x128xf32, #tpu.memory_space<vmem>>, vector<8x128xf32>
    tpu.vector_store %arg2[%c0_1, %c0_2], %2 {strides = array<i32>} : memref<8x128xf32, #tpu.memory_space<vmem>>, vector<8x128xf32>,
    return
  }
  func.func @transform_0(%arg0: i32) -> (i32, i32) {
    %c0_i32 = arith.constant 0 : i32
    %c0_i32_0 = arith.constant 0 : i32
    %c0_i32_1 = arith.constant 0 : i32
    return %c0_i32, %c0_i32_0 : i32, i32
  }
  func.func @transform_1(%arg0: i32) -> (i32, i32) {
    %c0_i32 = arith.constant 0 : i32
    %c0_i32_0 = arith.constant 0 : i32
    %c0_i32_1 = arith.constant 0 : i32
    return %c0_i32, %c0_i32_0 : i32, i32
  }
}

module attributes {stable_mosaic.version = 11 : i64} {
  func.func @adapter_bert_layer_kernel(%arg0: i32, %arg1: memref<32x128xbf16, #tpu.memory_space<vmem>>, %arg2: memref<32x128xbf16, #tpu.memory_space<vmem>>, %arg3: memref<128x128xbf16, #tpu.memory_space<vmem>>, %arg4: memref<1x128xf32, #tpu.memory_space<vmem>>, %arg5: memref<128x128xbf16, #tpu.memory_space<vmem>>, %arg6: memref<1x128xf32, #tpu.memory_space<vmem>>, %arg7: memref<128x128xbf16, #tpu.memory_space<vmem>>, %arg8: memref<1x128xf32, #tpu.memory_space<vmem>>, %arg9: memref<1x128xf32, #tpu.memory_space<vmem>>, %arg10: memref<1x128xf32, #tpu.memory_space<vmem>>, %arg11: memref<32x128xf32, #tpu.memory_space<vmem>>) attributes {dimension_semantics = [#tpu.dimension_semantics<parallel>], iteration_bounds = array<i64: 1>, scalar_prefetch = 0 : i64, scratch_operands = 0 : i64, tpu.core_type = #tpu.core_type<tc>, window_params = [{transform_indices = @transform_0, window_bounds = array<i64: 32, 128>}, {transform_indices = @transform_1, window_bounds = array<i64: 32, 128>}, {pipeline_mode = #tpu.pipeline_mode<synchronous>, transform_indices = @transform_2, window_bounds = array<i64: 128, 128>}, {pipeline_mode = #tpu.pipeline_mode<synchronous>, transform_indices = @transform_3, window_bounds = array<i64: 1, 128>}, {pipeline_mode = #tpu.pipeline_mode<synchronous>, transform_indices = @transform_4, window_bounds = array<i64: 128, 128>}, {pipeline_mode = #tpu.pipeline_mode<synchronous>, transform_indices = @transform_5, window_bounds = array<i64: 1, 128>}, {pipeline_mode = #tpu.pipeline_mode<synchronous>, transform_indices = @transform_6, window_bounds = array<i64: 128, 128>}, {pipeline_mode = #tpu.pipeline_mode<synchronous>, transform_indices = @transform_7, window_bounds = array<i64: 1, 128>}, {pipeline_mode = #tpu.pipeline_mode<synchronous>, transform_indices = @transform_8, window_bounds = array<i64: 1, 128>}, {pipeline_mode = #tpu.pipeline_mode<synchronous>, transform_indices = @transform_9, window_bounds = array<i64: 1, 128>}, {transform_indices = @transform_10, window_bounds = array<i64: 32, 128>}]} {
    %c0 = arith.constant 0 : index
    %c0_0 = arith.constant 0 : index
    %0 = vector.load %arg1[%c0, %c0_0] : memref<32x128xbf16, #tpu.memory_space<vmem>>, vector<32x128xbf16>
    %c0_1 = arith.constant 0 : index
    %c0_2 = arith.constant 0 : index
    %1 = vector.load %arg3[%c0_1, %c0_2] : memref<128x128xbf16, #tpu.memory_space<vmem>>, vector<128x128xbf16>
    %cst = arith.constant dense<0.000000e+00> : vector<32x128xf32>
    %2 = tpu.matmul %0, %1, %cst {dimension_numbers = #tpu.dot_dimension_numbers<[1], [0], [0], [1], [0, 0, 1, 1], [], []>} : vector<32x128xbf16>, vector<128x128xbf16>, vector<32x128xf32> -> vector<32x128xf32>
    %c0_3 = arith.constant 0 : index
    %c0_4 = arith.constant 0 : index
    %3 = vector.load %arg4[%c0_3, %c0_4] : memref<1x128xf32, #tpu.memory_space<vmem>>, vector<1x128xf32>
    %4 = vector.broadcast %3 : vector<1x128xf32> to vector<32x128xf32>
    %5 = arith.addf %2, %4 : vector<32x128xf32>
    %6 = arith.truncf %5 : vector<32x128xf32> to vector<32x128xbf16>
    %c0_5 = arith.constant 0 : index
    %c0_6 = arith.constant 0 : index
    %7 = vector.load %arg5[%c0_5, %c0_6] : memref<128x128xbf16, #tpu.memory_space<vmem>>, vector<128x128xbf16>
    %cst_7 = arith.constant dense<0.000000e+00> : vector<32x128xf32>
    %8 = tpu.matmul %6, %7, %cst_7 {dimension_numbers = #tpu.dot_dimension_numbers<[1], [0], [0], [1], [0, 0, 1, 1], [], []>} : vector<32x128xbf16>, vector<128x128xbf16>, vector<32x128xf32> -> vector<32x128xf32>
    %c0_8 = arith.constant 0 : index
    %c0_9 = arith.constant 0 : index
    %9 = vector.load %arg6[%c0_8, %c0_9] : memref<1x128xf32, #tpu.memory_space<vmem>>, vector<1x128xf32>
    %10 = vector.broadcast %9 : vector<1x128xf32> to vector<32x128xf32>
    %11 = arith.addf %8, %10 : vector<32x128xf32>
    %cst_10 = arith.constant 5.000000e-01 : f32
    %12 = vector.broadcast %cst_10 : f32 to vector<32x128xf32>
    %13 = arith.mulf %12, %11 : vector<32x128xf32>
    %cst_11 = arith.constant 0.707106769 : f32
    %14 = vector.broadcast %cst_11 : f32 to vector<32x128xf32>
    %15 = arith.mulf %11, %14 : vector<32x128xf32>
    %16 = math.erf %15 : vector<32x128xf32>
    %cst_12 = arith.constant 1.000000e+00 : f32
    %17 = vector.broadcast %cst_12 : f32 to vector<32x128xf32>
    %18 = arith.addf %17, %16 : vector<32x128xf32>
    %19 = arith.mulf %13, %18 : vector<32x128xf32>
    %20 = arith.truncf %19 : vector<32x128xf32> to vector<32x128xbf16>
    %c0_13 = arith.constant 0 : index
    %c0_14 = arith.constant 0 : index
    %21 = vector.load %arg7[%c0_13, %c0_14] : memref<128x128xbf16, #tpu.memory_space<vmem>>, vector<128x128xbf16>
    %cst_15 = arith.constant dense<0.000000e+00> : vector<32x128xf32>
    %22 = tpu.matmul %20, %21, %cst_15 {dimension_numbers = #tpu.dot_dimension_numbers<[1], [0], [0], [1], [0, 0, 1, 1], [], []>} : vector<32x128xbf16>, vector<128x128xbf16>, vector<32x128xf32> -> vector<32x128xf32>
    %c0_16 = arith.constant 0 : index
    %c0_17 = arith.constant 0 : index
    %23 = vector.load %arg8[%c0_16, %c0_17] : memref<1x128xf32, #tpu.memory_space<vmem>>, vector<1x128xf32>
    %24 = vector.broadcast %23 : vector<1x128xf32> to vector<32x128xf32>
    %25 = arith.addf %22, %24 : vector<32x128xf32>
    %26 = arith.addf %25, %5 : vector<32x128xf32>
    %c0_18 = arith.constant 0 : index
    %c0_19 = arith.constant 0 : index
    %27 = vector.load %arg2[%c0_18, %c0_19] : memref<32x128xbf16, #tpu.memory_space<vmem>>, vector<32x128xbf16>
    %28 = arith.extf %27 : vector<32x128xbf16> to vector<32x128xf32>
    %29 = arith.addf %26, %28 : vector<32x128xf32>
    %cst_20 = arith.constant dense<0.000000e+00> : vector<32xf32>
    %30 = vector.multi_reduction <add>, %29, %cst_20 [1] : vector<32x128xf32> to vector<32xf32>
    %31 = vector.shape_cast %30 : vector<32xf32> to vector<32x1xf32>
    %cst_21 = arith.constant 1.280000e+02 : f32
    %32 = vector.broadcast %cst_21 : f32 to vector<32x1xf32>
    %33 = arith.divf %31, %32 : vector<32x1xf32>
    %34 = arith.mulf %29, %29 : vector<32x128xf32>
    %cst_22 = arith.constant dense<0.000000e+00> : vector<32xf32>
    %35 = vector.multi_reduction <add>, %34, %cst_22 [1] : vector<32x128xf32> to vector<32xf32>
    %36 = vector.shape_cast %35 : vector<32xf32> to vector<32x1xf32>
    %cst_23 = arith.constant 1.280000e+02 : f32
    %37 = vector.broadcast %cst_23 : f32 to vector<32x1xf32>
    %38 = arith.divf %36, %37 : vector<32x1xf32>
    %39 = arith.mulf %33, %33 : vector<32x1xf32>
    %40 = arith.subf %38, %39 : vector<32x1xf32>
    %cst_24 = arith.constant 0.000000e+00 : f32
    %41 = vector.broadcast %cst_24 : f32 to vector<32x1xf32>
    %42 = arith.maximumf %40, %41 : vector<32x1xf32>
    %43 = vector.broadcast %33 : vector<32x1xf32> to vector<32x128xf32>
    %44 = arith.subf %29, %43 : vector<32x128xf32>
    %cst_25 = arith.constant 9.99999996E-13 : f32
    %45 = vector.broadcast %cst_25 : f32 to vector<32x1xf32>
    %46 = arith.addf %42, %45 : vector<32x1xf32>
    %47 = math.rsqrt %46 : vector<32x1xf32>
    %48 = vector.broadcast %47 : vector<32x1xf32> to vector<32x128xf32>
    %49 = arith.mulf %44, %48 : vector<32x128xf32>
    %c0_26 = arith.constant 0 : index
    %c0_27 = arith.constant 0 : index
    %50 = vector.load %arg9[%c0_26, %c0_27] : memref<1x128xf32, #tpu.memory_space<vmem>>, vector<1x128xf32>
    %51 = vector.broadcast %50 : vector<1x128xf32> to vector<32x128xf32>
    %52 = arith.mulf %49, %51 : vector<32x128xf32>
    %c0_28 = arith.constant 0 : index
    %c0_29 = arith.constant 0 : index
    %53 = vector.load %arg10[%c0_28, %c0_29] : memref<1x128xf32, #tpu.memory_space<vmem>>, vector<1x128xf32>
    %54 = vector.broadcast %53 : vector<1x128xf32> to vector<32x128xf32>
    %55 = arith.addf %52, %54 : vector<32x128xf32>
    %c0_30 = arith.constant 0 : index
    %c0_31 = arith.constant 0 : index
    %56 = vector.load %arg11[%c0_30, %c0_31] : memref<32x128xf32, #tpu.memory_space<vmem>>, vector<32x128xf32>
    tpu.vector_store %arg11[%c0_30, %c0_31], %55 {strides = array<i32>} : memref<32x128xf32, #tpu.memory_space<vmem>>, vector<32x128xf32>,
    return
  }
  func.func @transform_0(%arg0: i32) -> (i32, i32) {
    %c0_i32 = arith.constant 0 : i32
    %c0_i32_0 = arith.constant 0 : i32
    return %arg0, %c0_i32 : i32, i32
  }
  func.func @transform_1(%arg0: i32) -> (i32, i32) {
    %c0_i32 = arith.constant 0 : i32
    %c0_i32_0 = arith.constant 0 : i32
    return %arg0, %c0_i32 : i32, i32
  }
  func.func @transform_2(%arg0: i32) -> (i32, i32) {
    %c0_i32 = arith.constant 0 : i32
    %c0_i32_0 = arith.constant 0 : i32
    %c0_i32_1 = arith.constant 0 : i32
    return %c0_i32, %c0_i32_0 : i32, i32
  }
  func.func @transform_3(%arg0: i32) -> (i32, i32) {
    %c0_i32 = arith.constant 0 : i32
    %c0_i32_0 = arith.constant 0 : i32
    %c0_i32_1 = arith.constant 0 : i32
    return %c0_i32, %c0_i32_0 : i32, i32
  }
  func.func @transform_4(%arg0: i32) -> (i32, i32) {
    %c0_i32 = arith.constant 0 : i32
    %c0_i32_0 = arith.constant 0 : i32
    %c0_i32_1 = arith.constant 0 : i32
    return %c0_i32, %c0_i32_0 : i32, i32
  }
  func.func @transform_5(%arg0: i32) -> (i32, i32) {
    %c0_i32 = arith.constant 0 : i32
    %c0_i32_0 = arith.constant 0 : i32
    %c0_i32_1 = arith.constant 0 : i32
    return %c0_i32, %c0_i32_0 : i32, i32
  }
  func.func @transform_6(%arg0: i32) -> (i32, i32) {
    %c0_i32 = arith.constant 0 : i32
    %c0_i32_0 = arith.constant 0 : i32
    %c0_i32_1 = arith.constant 0 : i32
    return %c0_i32, %c0_i32_0 : i32, i32
  }
  func.func @transform_7(%arg0: i32) -> (i32, i32) {
    %c0_i32 = arith.constant 0 : i32
    %c0_i32_0 = arith.constant 0 : i32
    %c0_i32_1 = arith.constant 0 : i32
    return %c0_i32, %c0_i32_0 : i32, i32
  }
  func.func @transform_8(%arg0: i32) -> (i32, i32) {
    %c0_i32 = arith.constant 0 : i32
    %c0_i32_0 = arith.constant 0 : i32
    %c0_i32_1 = arith.constant 0 : i32
    return %c0_i32, %c0_i32_0 : i32, i32
  }
  func.func @transform_9(%arg0: i32) -> (i32, i32) {
    %c0_i32 = arith.constant 0 : i32
    %c0_i32_0 = arith.constant 0 : i32
    %c0_i32_1 = arith.constant 0 : i32
    return %c0_i32, %c0_i32_0 : i32, i32
  }
  func.func @transform_10(%arg0: i32) -> (i32, i32) {
    %c0_i32 = arith.constant 0 : i32
    %c0_i32_0 = arith.constant 0 : i32
    return %arg0, %c0_i32 : i32, i32
  }
}

</mosaic_0001>

<llo_original>
// kernel: tpu_custom_call.1
$region0: #{tpu_custom_call.1}
  #allocation0 [shape = 'u32[]', space=smem, size = 0x4, offset = 0x4, fixed_abs, tag = 'smem constant byte address 0x4 - core index']
  #allocation1 [shape = 'u32[144,128]{1,0:T(1,128)}', space=vmem, size = 0x12000, scoped, tag = 'internal scratch']
  %s0 = inlined_call_operand.hbm [shape: f32[8,128], index: 0, kind: input, shape index: {}]
  %s1 = inlined_call_operand.hbm [shape: f32[8,128], index: 1, kind: output, shape index: {}]
  %s2 = sld [smem:[#allocation0]]
  $region41: #{tpu_custom_call.1} parent=0
    _
  %s4 = ssub.s32 1, %s2
  %s5 = scalar_select 0, %s4, %s2
  $region1: #{tpu_custom_call.1} parent=0
    #allocation2 [shape = 'u8[4096]{0}', space=vmem, size = 0x1000, scoped, tag = 'input window, operand 0, single buffered']
    #allocation3 [shape = 's32[2]{0}', space=sflag, size = 0x8, scoped, tag = 'scoped memory for tpu_custom_call.1']
    #allocation4 [shape = 's32[2]{0}', space=sflag, size = 0x8, scoped, tag = 'scoped memory for tpu_custom_call.1']
    #allocation5 [shape = 'u8[4096]{0}', space=vmem, size = 0x1000, scoped, tag = 'output window, operand 0, single buffered']
    %6 = vsyncpa [#allocation3], 0
    %7 = vsyncpa [#allocation4], 0
    loop: start=0, step=1, limit=4
    $region2: #{tpu_custom_call.1} parent=1 // loop_pre_header
      _
    $region3: #{tpu_custom_call.1} parent=1 // loop_header
      %s9 = sphi 0, %s13
      %p10 = scmp.ge.s32.totalorder %s9, 4
      %s17 = sphi 0, %s17
      %s19 = sphi 0, %s17
      %s20 = sphi 0, %s19
      %s34 = sphi 0, %s20
      %s38 = sphi 0, %s38
      %s40 = sphi 0, %s38
      %s41 = sphi 0, %s40
      %s55 = sphi 0, %s41
    $region4: #{tpu_custom_call.1} parent=1 // loop_header_branch
      %12 = sbr.rel (%p10) target = $region8
    $region5: #{tpu_custom_call.1} parent=1 // loop_body
      %s14 = ssub.s32 %s9, 1
      %s15 = ssub.s32 %s9, 2
      %s16 = sadd.s32 %s9, 1
      %s18 = sadd.s32 %s17, 1
      %p21 = scmp.eq.s32.totalorder %s9, 1
      %p22 = scmp.ne.s32.totalorder %s17, %s19
      %p23 = scmp.eq.s32.totalorder %s9, 0
      %p24 = por %p22, %p23
      %p25 = scmp.ne.s32.totalorder %s17, %s19
      %p26 = scmp.eq.s32.totalorder %s14, 1
      %p27 = por %p25, %p26
      %p28 = scmp.ne.s32.totalorder %s19, %s20
      %p29 = scmp.eq.s32.totalorder %s14, 0
      %p30 = por %p28, %p29
      %p31 = scmp.ne.s32.totalorder %s19, %s20
      %p32 = scmp.eq.s32.totalorder %s15, 1
      %p33 = por %p31, %p32
      %p35 = scmp.ne.s32.totalorder %s20, %s34
      %p36 = scmp.eq.s32.totalorder %s15, 0
      %p37 = por %p35, %p36
      %s39 = sadd.s32 %s38, 1
      %p42 = scmp.eq.s32.totalorder %s9, 1
      %p43 = scmp.ne.s32.totalorder %s38, %s40
      %p44 = scmp.eq.s32.totalorder %s9, 0
      %p45 = por %p43, %p44
      %p46 = scmp.ne.s32.totalorder %s38, %s40
      %p47 = scmp.eq.s32.totalorder %s14, 1
      %p48 = por %p46, %p47
      %p49 = scmp.ne.s32.totalorder %s40, %s41
      %p50 = scmp.eq.s32.totalorder %s14, 0
      %p51 = por %p49, %p50
      %p52 = scmp.ne.s32.totalorder %s40, %s41
      %p53 = scmp.eq.s32.totalorder %s15, 1
      %p54 = por %p52, %p53
      %p56 = scmp.ne.s32.totalorder %s41, %s55
      %p57 = scmp.eq.s32.totalorder %s15, 0
      %p58 = por %p56, %p57
      %p59 = scmp.le.s32.totalorder 1, %s9
      %p60 = scmp.lt.s32.totalorder %s9, 3
      %p61 = pnand %p59, %p60
      %p62 = pneg %p61
      // Predicated region
      $region9: #{tpu_custom_call.1} parent=5 // pred_check
        _
      $region10: #{tpu_custom_call.1} parent=5 // pred_check_branch
        %64 = sbr.rel (%p61) target = $region12
      $region11: #{tpu_custom_call.1} parent=5 // pred_region
        %s65 = ssub.s32 %s9, 1
        // Predicated region
        $region13: #{tpu_custom_call.1} parent=11 // pred_check
          %p66 = pneg %p30
        $region14: #{tpu_custom_call.1} parent=11 // pred_check_branch
          %68 = sbr.rel (%p66) target = $region16
        $region15: #{tpu_custom_call.1} parent=11 // pred_region
          %s70 = ssub.s32 128, 128
          %71 = vsyncadd [#allocation3], %s70
          %s73 = sshll.u32 [#allocation2], 4
          %s74 = int_to_ptr.vmem [resolvable:$true] %s73
          %76 = dma.hbm_to_vmem [thread:$0]  %s0, 128, %s74, [#allocation3]
        $region16: #{tpu_custom_call.1} parent=11 // pred_fallthru
          _
      $region12: #{tpu_custom_call.1} parent=5 // pred_fallthru
        _
      %p77 = scmp.lt.s32.totalorder %s9, 2
      // Predicated region
      $region17: #{tpu_custom_call.1} parent=5 // pred_check
        %p78 = pneg %p77
      $region18: #{tpu_custom_call.1} parent=5 // pred_check_branch
        %80 = sbr.rel (%p78) target = $region20
      $region19: #{tpu_custom_call.1} parent=5 // pred_region
        _
      $region20: #{tpu_custom_call.1} parent=5 // pred_fallthru
        _
      %p81 = scmp.le.s32.totalorder 1, %s9
      %p82 = scmp.lt.s32.totalorder %s9, 3
      %p83 = pnand %p81, %p82
      %p84 = pneg %p83
      // Predicated region
      $region21: #{tpu_custom_call.1} parent=5 // pred_check
        _
      $region22: #{tpu_custom_call.1} parent=5 // pred_check_branch
        %86 = sbr.rel (%p83) target = $region24
      $region23: #{tpu_custom_call.1} parent=5 // pred_region
        %s87 = ssub.s32 %s9, 1
        // Predicated region
        $region25: #{tpu_custom_call.1} parent=23 // pred_check
          %p88 = pneg %p30
        $region26: #{tpu_custom_call.1} parent=23 // pred_check_branch
          %90 = sbr.rel (%p88) target = $region28
        $region27: #{tpu_custom_call.1} parent=23 // pred_region
          %91 = dma.done [#allocation3], 128
        $region28: #{tpu_custom_call.1} parent=23 // pred_fallthru
          _
        %p92 = pneg %p30
        %p93 = pneg %p27
        %p94 = pneg %p51
        %p95 = pneg %p48
        %v96 = vld [vmem:[#allocation2] sm:$0xff]
        %v97 = vmul.f32 %v96, 2.0
        %98 = vst [vmem:[#allocation5] sm:$0xff] %v97
        // Predicated region
        $region29: #{tpu_custom_call.1} parent=23 // pred_check
          %p99 = pneg %p48
        $region30: #{tpu_custom_call.1} parent=23 // pred_check_branch
          %101 = sbr.rel (%p99) target = $region32
        $region31: #{tpu_custom_call.1} parent=23 // pred_region
          %s103 = ssub.s32 128, 128
          %104 = vsyncadd [#allocation4], %s103
          %s106 = sshll.u32 [#allocation5], 4
          %s107 = int_to_ptr.vmem [resolvable:$true] %s106
          %109 = dma.vmem_to_hbm [thread:$0]  %s107, 128, %s1, [#allocation4]
        $region32: #{tpu_custom_call.1} parent=23 // pred_fallthru
          _
        // Predicated region
        $region33: #{tpu_custom_call.1} parent=23 // pred_check
          %p110 = pneg %p48
        $region34: #{tpu_custom_call.1} parent=23 // pred_check_branch
          %112 = sbr.rel (%p110) target = $region36
        $region35: #{tpu_custom_call.1} parent=23 // pred_region
          %113 = dma.done [#allocation4], 128
        $region36: #{tpu_custom_call.1} parent=23 // pred_fallthru
          _
      $region24: #{tpu_custom_call.1} parent=5 // pred_fallthru
        _
      %p114 = scmp.le.s32.totalorder 2, %s9
      // Predicated region
      $region37: #{tpu_custom_call.1} parent=5 // pred_check
        %p115 = pneg %p114
      $region38: #{tpu_custom_call.1} parent=5 // pred_check_branch
        %117 = sbr.rel (%p115) target = $region40
      $region39: #{tpu_custom_call.1} parent=5 // pred_region
        %s118 = ssub.s32 %s9, 2
      $region40: #{tpu_custom_call.1} parent=5 // pred_fallthru
        _
    $region6: #{tpu_custom_call.1} parent=1 // loop_footer
      %s13 = sadd.s32 1, %s9
    $region7: #{tpu_custom_call.1} parent=1 // loop_footer_branch
      %8 = sbr.rel target = $region3
    $region8: #{tpu_custom_call.1} parent=1 // loop_exit
      _
    %119 = vsyncpa [#allocation3], 1
    %s120 = scalar_lea.sflag [#allocation3], 1
    %121 = vsyncpa %s120, 1
    %122 = vsyncpa [#allocation4], 1
    %s123 = scalar_lea.sflag [#allocation4], 1
    %124 = vsyncpa %s123, 1

// kernel: _adapter_bert_layer_impl.1
$region0: #{_adapter_bert_layer_impl.1}
  #allocation0 [shape = 'u32[]', space=smem, size = 0x4, offset = 0x4, fixed_abs, tag = 'smem constant byte address 0x4 - core index']
  #allocation1 [shape = 'u32[144,128]{1,0:T(1,128)}', space=vmem, size = 0x12000, scoped, tag = 'internal scratch']
  %s0 = inlined_call_operand.vmem [shape: bf16[32,128], index: 0, kind: input, shape index: {}]
  %s1 = inlined_call_operand.vmem [shape: bf16[32,128], index: 1, kind: input, shape index: {}]
  %s2 = inlined_call_operand.vmem [shape: bf16[128,128], index: 2, kind: input, shape index: {}]
  %s3 = inlined_call_operand.vmem [shape: f32[1,128], index: 3, kind: input, shape index: {}]
  %s4 = inlined_call_operand.vmem [shape: bf16[128,128], index: 4, kind: input, shape index: {}]
  %s5 = inlined_call_operand.vmem [shape: f32[1,128], index: 5, kind: input, shape index: {}]
  %s6 = inlined_call_operand.vmem [shape: bf16[128,128], index: 6, kind: input, shape index: {}]
  %s7 = inlined_call_operand.vmem [shape: f32[1,128], index: 7, kind: input, shape index: {}]
  %s8 = inlined_call_operand.vmem [shape: f32[1,128], index: 8, kind: input, shape index: {}]
  %s9 = inlined_call_operand.vmem [shape: f32[1,128], index: 9, kind: input, shape index: {}]
  %s10 = inlined_call_operand.vmem [shape: f32[32,128], index: 10, kind: output, shape index: {}]
  %s11 = sld [smem:[#allocation0]]
  $region50: #{_adapter_bert_layer_impl.1} parent=0
    _
  %s13 = ssub.s32 1, %s11
  %s14 = scalar_select 0, %s13, %s11
  // Predicated region
  $region2: #{_adapter_bert_layer_impl.1} parent=0 // pred_check
    _
  $region3: #{_adapter_bert_layer_impl.1} parent=0 // pred_check_branch
    %16 = sbr.rel (0) target = $region5
  $region4: #{_adapter_bert_layer_impl.1} parent=0 // pred_region
    _
  $region5: #{_adapter_bert_layer_impl.1} parent=0 // pred_fallthru
    _
  // Predicated region
  $region6: #{_adapter_bert_layer_impl.1} parent=0 // pred_check
    _
  $region7: #{_adapter_bert_layer_impl.1} parent=0 // pred_check_branch
    %18 = sbr.rel (0) target = $region9
  $region8: #{_adapter_bert_layer_impl.1} parent=0 // pred_region
    _
  $region9: #{_adapter_bert_layer_impl.1} parent=0 // pred_fallthru
    _
  // Predicated region
  $region10: #{_adapter_bert_layer_impl.1} parent=0 // pred_check
    _
  $region11: #{_adapter_bert_layer_impl.1} parent=0 // pred_check_branch
    %20 = sbr.rel (0) target = $region13
  $region12: #{_adapter_bert_layer_impl.1} parent=0 // pred_region
    _
  $region13: #{_adapter_bert_layer_impl.1} parent=0 // pred_fallthru
    _
  // Predicated region
  $region14: #{_adapter_bert_layer_impl.1} parent=0 // pred_check
    _
  $region15: #{_adapter_bert_layer_impl.1} parent=0 // pred_check_branch
    %22 = sbr.rel (0) target = $region17
  $region16: #{_adapter_bert_layer_impl.1} parent=0 // pred_region
    _
  $region17: #{_adapter_bert_layer_impl.1} parent=0 // pred_fallthru
    _
  // Predicated region
  $region18: #{_adapter_bert_layer_impl.1} parent=0 // pred_check
    _
  $region19: #{_adapter_bert_layer_impl.1} parent=0 // pred_check_branch
    %24 = sbr.rel (0) target = $region21
  $region20: #{_adapter_bert_layer_impl.1} parent=0 // pred_region
    _
  $region21: #{_adapter_bert_layer_impl.1} parent=0 // pred_fallthru
    _
  // Predicated region
  $region22: #{_adapter_bert_layer_impl.1} parent=0 // pred_check
    _
  $region23: #{_adapter_bert_layer_impl.1} parent=0 // pred_check_branch
    %26 = sbr.rel (0) target = $region25
  $region24: #{_adapter_bert_layer_impl.1} parent=0 // pred_region
    _
  $region25: #{_adapter_bert_layer_impl.1} parent=0 // pred_fallthru
    _
  // Predicated region
  $region26: #{_adapter_bert_layer_impl.1} parent=0 // pred_check
    _
  $region27: #{_adapter_bert_layer_impl.1} parent=0 // pred_check_branch
    %28 = sbr.rel (0) target = $region29
  $region28: #{_adapter_bert_layer_impl.1} parent=0 // pred_region
    _
  $region29: #{_adapter_bert_layer_impl.1} parent=0 // pred_fallthru
    _
  // Predicated region
  $region30: #{_adapter_bert_layer_impl.1} parent=0 // pred_check
    _
  $region31: #{_adapter_bert_layer_impl.1} parent=0 // pred_check_branch
    %30 = sbr.rel (0) target = $region33
  $region32: #{_adapter_bert_layer_impl.1} parent=0 // pred_region
    _
  $region33: #{_adapter_bert_layer_impl.1} parent=0 // pred_fallthru
    _
  // Predicated region
  $region34: #{_adapter_bert_layer_impl.1} parent=0 // pred_check
    _
  $region35: #{_adapter_bert_layer_impl.1} parent=0 // pred_check_branch
    %32 = sbr.rel (0) target = $region37
  $region36: #{_adapter_bert_layer_impl.1} parent=0 // pred_region
    _
  $region37: #{_adapter_bert_layer_impl.1} parent=0 // pred_fallthru
    _
  // Predicated region
  $region38: #{_adapter_bert_layer_impl.1} parent=0 // pred_check
    _
  $region39: #{_adapter_bert_layer_impl.1} parent=0 // pred_check_branch
    %34 = sbr.rel (0) target = $region41
  $region40: #{_adapter_bert_layer_impl.1} parent=0 // pred_region
    _
  $region41: #{_adapter_bert_layer_impl.1} parent=0 // pred_fallthru
    _
  %v36 = vld [vmem:[%s0] sm:$0xf]
  %v37 = vld [vmem:[%s0 + $0x4] sm:$0xf]
  %v38 = vld [vmem:[%s0 + $0x8] sm:$0xf]
  %v39 = vld [vmem:[%s0 + $0xc] sm:$0xf]
  %v40 = vld [vmem:[%s2] sm:$0xf]
  %v41 = vld [vmem:[%s2 + $0x4] sm:$0xf]
  %v42 = vld [vmem:[%s2 + $0x8] sm:$0xf]
  %v43 = vld [vmem:[%s2 + $0xc] sm:$0xf]
  %v44 = vld [vmem:[%s2 + $0x10] sm:$0xf]
  %v45 = vld [vmem:[%s2 + $0x14] sm:$0xf]
  %v46 = vld [vmem:[%s2 + $0x18] sm:$0xf]
  %v47 = vld [vmem:[%s2 + $0x1c] sm:$0xf]
  %v48 = vld [vmem:[%s2 + $0x20] sm:$0xf]
  %v49 = vld [vmem:[%s2 + $0x24] sm:$0xf]
  %v50 = vld [vmem:[%s2 + $0x28] sm:$0xf]
  %v51 = vld [vmem:[%s2 + $0x2c] sm:$0xf]
  %v52 = vld [vmem:[%s2 + $0x30] sm:$0xf]
  %v53 = vld [vmem:[%s2 + $0x34] sm:$0xf]
  %v54 = vld [vmem:[%s2 + $0x38] sm:$0xf]
  %v55 = vld [vmem:[%s2 + $0x3c] sm:$0xf]
  %v56 = vld [vmem:[%s3] sm:$0x1]
  %v58 = vlaneseq
  %v59 = vshrl.u32 %v58, 7
  %v60 = vsub.s32 0, %v59
  %v61 = vrot.slane %v56, %v60
  %v67 = vunpack.c.l.b16 %v36
  %v68 = vunpack.c.l.b16 %v37
  %v69 = vunpack.c.l.b16 %v38
  %v70 = vunpack.c.l.b16 %v39
  %v71 = vpack.c.b16 %v68, %v67
  %v72 = vpack.c.b16 %v70, %v69
  %v91 = vunpack.c.l.b16 %v40
  %v92 = vunpack.c.l.b16 %v41
  %v93 = vunpack.c.l.b16 %v42
  %v94 = vunpack.c.l.b16 %v43
  %v95 = vunpack.c.l.b16 %v44
  %v96 = vunpack.c.l.b16 %v45
  %v97 = vunpack.c.l.b16 %v46
  %v98 = vunpack.c.l.b16 %v47
  %v99 = vunpack.c.l.b16 %v48
  %v100 = vunpack.c.l.b16 %v49
  %v101 = vunpack.c.l.b16 %v50
  %v102 = vunpack.c.l.b16 %v51
  %v103 = vunpack.c.l.b16 %v52
  %v104 = vunpack.c.l.b16 %v53
  %v105 = vunpack.c.l.b16 %v54
  %v106 = vunpack.c.l.b16 %v55
  %v107 = vpack.c.b16 %v92, %v91
  %v108 = vpack.c.b16 %v94, %v93
  %v109 = vpack.c.b16 %v96, %v95
  %v110 = vpack.c.b16 %v98, %v97
  %v111 = vpack.c.b16 %v100, %v99
  %v112 = vpack.c.b16 %v102, %v101
  %v113 = vpack.c.b16 %v104, %v103
  %v114 = vpack.c.b16 %v106, %v105
  %123 = vmatprep.subr.bf16.mxu0 0
  %124 = vmatpush1.bf16.msra.mxu0 %v114
  %125 = vmatprep.subr.bf16.mxu0 0
  %126 = vmatpush1.bf16.msra.mxu0 %v113
  %127 = vmatprep.subr.bf16.mxu0 0
  %128 = vmatpush1.bf16.msra.mxu0 %v112
  %129 = vmatprep.subr.bf16.mxu0 0
  %130 = vmatpush1.bf16.msra.mxu0 %v111
  %131 = vmatprep.subr.bf16.mxu0 0
  %132 = vmatpush1.bf16.msra.mxu0 %v110
  %133 = vmatprep.subr.bf16.mxu0 0
  %134 = vmatpush1.bf16.msra.mxu0 %v109
  %135 = vmatprep.subr.bf16.mxu0 0
  %136 = vmatpush1.bf16.msra.mxu0 %v108
  %137 = vmatprep.subr.bf16.mxu0 0
  %138 = vmatpush1.bf16.msra.mxu0 %v107
  %139 = vmatprep.subr.bf16.mxu0 0
  %140 = vmatpush2.bf16.msra.mxu0 0
  %141 = vmatprep.subr.bf16.mxu0 0
  %142 = vmatpush2.bf16.msra.mxu0 0
  %143 = vmatprep.subr.bf16.mxu0 0
  %144 = vmatpush2.bf16.msra.mxu0 0
  %145 = vmatprep.subr.bf16.mxu0 0
  %146 = vmatpush2.bf16.msra.mxu0 0
  %147 = vmatprep.subr.bf16.mxu0 0
  %148 = vmatpush2.bf16.msra.mxu0 0
  %149 = vmatprep.subr.bf16.mxu0 0
  %150 = vmatpush2.bf16.msra.mxu0 0
  %151 = vmatprep.subr.bf16.mxu0 0
  %152 = vmatpush2.bf16.msra.mxu0 0
  %153 = vmatprep.subr.bf16.mxu0 0
  %154 = vmatpush2.bf16.msra.mxu0 0
  %155 = vmatprep.mubr.bf16.mxu0 0
  %156 = vmatmul.mubr.bf16.gmra.mxu0 %v71
  %v157 = vpop.f32.mrf.mxu0
  %v158 = vadd.f32 %v61, %v157
  %v159 = vpop.f32.mrf.mxu0
  %v160 = vpop.f32.mrf.mxu0
  %v161 = vadd.f32 %v61, %v160
  %v162 = vpop.f32.mrf.mxu0
  %163 = vmatprep.mubr.bf16.mxu0 0
  %164 = vmatmul.mubr.bf16.gmra.mxu0 %v72
  %v165 = vpop.f32.mrf.mxu0
  %v166 = vadd.f32 %v61, %v165
  %v167 = vpop.f32.mrf.mxu0
  %v168 = vpop.f32.mrf.mxu0
  %v169 = vadd.f32 %v61, %v168
  %v170 = vpop.f32.mrf.mxu0
  %171 = vdwg.mxu0
  %v172 = vpack.c.bf16 %v161, %v158
  %v173 = vpack.c.bf16 %v169, %v166
  %v174 = vld [vmem:[%s4] sm:$0xf]
  %v175 = vld [vmem:[%s4 + $0x4] sm:$0xf]
  %v176 = vld [vmem:[%s4 + $0x8] sm:$0xf]
  %v177 = vld [vmem:[%s4 + $0xc] sm:$0xf]
  %v178 = vld [vmem:[%s4 + $0x10] sm:$0xf]
  %v179 = vld [vmem:[%s4 + $0x14] sm:$0xf]
  %v180 = vld [vmem:[%s4 + $0x18] sm:$0xf]
  %v181 = vld [vmem:[%s4 + $0x1c] sm:$0xf]
  %v182 = vld [vmem:[%s4 + $0x20] sm:$0xf]
  %v183 = vld [vmem:[%s4 + $0x24] sm:$0xf]
  %v184 = vld [vmem:[%s4 + $0x28] sm:$0xf]
  %v185 = vld [vmem:[%s4 + $0x2c] sm:$0xf]
  %v186 = vld [vmem:[%s4 + $0x30] sm:$0xf]
  %v187 = vld [vmem:[%s4 + $0x34] sm:$0xf]
  %v188 = vld [vmem:[%s4 + $0x38] sm:$0xf]
  %v189 = vld [vmem:[%s4 + $0x3c] sm:$0xf]
  %v190 = vld [vmem:[%s5] sm:$0x1]
  %v192 = vlaneseq
  %v193 = vshrl.u32 %v192, 7
  %v194 = vsub.s32 0, %v193
  %v195 = vrot.slane %v190, %v194
  %v213 = vunpack.c.l.b16 %v174
  %v214 = vunpack.c.l.b16 %v175
  %v215 = vunpack.c.l.b16 %v176
  %v216 = vunpack.c.l.b16 %v177
  %v217 = vunpack.c.l.b16 %v178
  %v218 = vunpack.c.l.b16 %v179
  %v219 = vunpack.c.l.b16 %v180
  %v220 = vunpack.c.l.b16 %v181
  %v221 = vunpack.c.l.b16 %v182
  %v222 = vunpack.c.l.b16 %v183
  %v223 = vunpack.c.l.b16 %v184
  %v224 = vunpack.c.l.b16 %v185
  %v225 = vunpack.c.l.b16 %v186
  %v226 = vunpack.c.l.b16 %v187
  %v227 = vunpack.c.l.b16 %v188
  %v228 = vunpack.c.l.b16 %v189
  %v229 = vpack.c.b16 %v214, %v213
  %v230 = vpack.c.b16 %v216, %v215
  %v231 = vpack.c.b16 %v218, %v217
  %v232 = vpack.c.b16 %v220, %v219
  %v233 = vpack.c.b16 %v222, %v221
  %v234 = vpack.c.b16 %v224, %v223
  %v235 = vpack.c.b16 %v226, %v225
  %v236 = vpack.c.b16 %v228, %v227
  %245 = vmatprep.subr.bf16.mxu0 0
  %246 = vmatpush1.bf16.msra.mxu0 %v236
  %247 = vmatprep.subr.bf16.mxu0 0
  %248 = vmatpush1.bf16.msra.mxu0 %v235
  %249 = vmatprep.subr.bf16.mxu0 0
  %250 = vmatpush1.bf16.msra.mxu0 %v234
  %251 = vmatprep.subr.bf16.mxu0 0
  %252 = vmatpush1.bf16.msra.mxu0 %v233
  %253 = vmatprep.subr.bf16.mxu0 0
  %254 = vmatpush1.bf16.msra.mxu0 %v232
  %255 = vmatprep.subr.bf16.mxu0 0
  %256 = vmatpush1.bf16.msra.mxu0 %v231
  %257 = vmatprep.subr.bf16.mxu0 0
  %258 = vmatpush1.bf16.msra.mxu0 %v230
  %259 = vmatprep.subr.bf16.mxu0 0
  %260 = vmatpush1.bf16.msra.mxu0 %v229
  %261 = vmatprep.subr.bf16.mxu0 0
  %262 = vmatpush2.bf16.msra.mxu0 0
  %263 = vmatprep.subr.bf16.mxu0 0
  %264 = vmatpush2.bf16.msra.mxu0 0
  %265 = vmatprep.subr.bf16.mxu0 0
  %266 = vmatpush2.bf16.msra.mxu0 0
  %267 = vmatprep.subr.bf16.mxu0 0
  %268 = vmatpush2.bf16.msra.mxu0 0
  %269 = vmatprep.subr.bf16.mxu0 0
  %270 = vmatpush2.bf16.msra.mxu0 0
  %271 = vmatprep.subr.bf16.mxu0 0
  %272 = vmatpush2.bf16.msra.mxu0 0
  %273 = vmatprep.subr.bf16.mxu0 0
  %274 = vmatpush2.bf16.msra.mxu0 0
  %275 = vmatprep.subr.bf16.mxu0 0
  %276 = vmatpush2.bf16.msra.mxu0 0
  %277 = vmatprep.mubr.bf16.mxu0 0
  %278 = vmatmul.mubr.bf16.gmra.mxu0 %v172
  %v279 = vpop.f32.mrf.mxu0
  %v280 = vadd.f32 %v195, %v279
  %v281 = vpop.f32.mrf.mxu0
  %v282 = vpop.f32.mrf.mxu0
  %v283 = vadd.f32 %v195, %v282
  %v284 = vpop.f32.mrf.mxu0
  %285 = vmatprep.mubr.bf16.mxu0 0
  %286 = vmatmul.mubr.bf16.gmra.mxu0 %v173
  %v287 = vpop.f32.mrf.mxu0
  %v288 = vadd.f32 %v195, %v287
  %v289 = vpop.f32.mrf.mxu0
  %v290 = vpop.f32.mrf.mxu0
  %v291 = vadd.f32 %v195, %v290
  %v292 = vpop.f32.mrf.mxu0
  %293 = vdwg.mxu0
  %v294 = vmul.f32 %v280, 0.5
  %v295 = vmul.f32 %v283, 0.5
  %v296 = vmul.f32 %v288, 0.5
  %v297 = vmul.f32 %v291, 0.5
  %v298 = vmul.f32 %v280, 0.70710677
  %v299 = vmul.f32 %v283, 0.70710677
  %v300 = vmul.f32 %v288, 0.70710677
  %v301 = vmul.f32 %v291, 0.70710677
  %v302 = verf.f32.pop %v298
  %v303 = verf.f32.pop %v299
  %v304 = verf.f32.pop %v300
  %v305 = verf.f32.pop %v301
  %v306 = vadd.f32 %v302, 1.0
  %v307 = vadd.f32 %v303, 1.0
  %v308 = vadd.f32 %v304, 1.0
  %v309 = vadd.f32 %v305, 1.0
  %v310 = vmul.f32 %v294, %v306
  %v311 = vmul.f32 %v295, %v307
  %v312 = vmul.f32 %v296, %v308
  %v313 = vmul.f32 %v297, %v309
  %v314 = vpack.c.bf16 %v311, %v310
  %v315 = vpack.c.bf16 %v313, %v312
  %v316 = vld [vmem:[%s6] sm:$0xf]
  %v317 = vld [vmem:[%s6 + $0x4] sm:$0xf]
  %v318 = vld [vmem:[%s6 + $0x8] sm:$0xf]
  %v319 = vld [vmem:[%s6 + $0xc] sm:$0xf]
  %v320 = vld [vmem:[%s6 + $0x10] sm:$0xf]
  %v321 = vld [vmem:[%s6 + $0x14] sm:$0xf]
  %v322 = vld [vmem:[%s6 + $0x18] sm:$0xf]
  %v323 = vld [vmem:[%s6 + $0x1c] sm:$0xf]
  %v324 = vld [vmem:[%s6 + $0x20] sm:$0xf]
  %v325 = vld [vmem:[%s6 + $0x24] sm:$0xf]
  %v326 = vld [vmem:[%s6 + $0x28] sm:$0xf]
  %v327 = vld [vmem:[%s6 + $0x2c] sm:$0xf]
  %v328 = vld [vmem:[%s6 + $0x30] sm:$0xf]
  %v329 = vld [vmem:[%s6 + $0x34] sm:$0xf]
  %v330 = vld [vmem:[%s6 + $0x38] sm:$0xf]
  %v331 = vld [vmem:[%s6 + $0x3c] sm:$0xf]
  %v332 = vld [vmem:[%s7] sm:$0x1]
  %v334 = vlaneseq
  %v335 = vshrl.u32 %v334, 7
  %v336 = vsub.s32 0, %v335
  %v337 = vrot.slane %v332, %v336
  %v355 = vunpack.c.l.b16 %v316
  %v356 = vunpack.c.l.b16 %v317
  %v357 = vunpack.c.l.b16 %v318
  %v358 = vunpack.c.l.b16 %v319
  %v359 = vunpack.c.l.b16 %v320
  %v360 = vunpack.c.l.b16 %v321
  %v361 = vunpack.c.l.b16 %v322
  %v362 = vunpack.c.l.b16 %v323
  %v363 = vunpack.c.l.b16 %v324
  %v364 = vunpack.c.l.b16 %v325
  %v365 = vunpack.c.l.b16 %v326
  %v366 = vunpack.c.l.b16 %v327
  %v367 = vunpack.c.l.b16 %v328
  %v368 = vunpack.c.l.b16 %v329
  %v369 = vunpack.c.l.b16 %v330
  %v370 = vunpack.c.l.b16 %v331
  %v371 = vpack.c.b16 %v356, %v355
  %v372 = vpack.c.b16 %v358, %v357
  %v373 = vpack.c.b16 %v360, %v359
  %v374 = vpack.c.b16 %v362, %v361
  %v375 = vpack.c.b16 %v364, %v363
  %v376 = vpack.c.b16 %v366, %v365
  %v377 = vpack.c.b16 %v368, %v367
  %v378 = vpack.c.b16 %v370, %v369
  %387 = vmatprep.subr.bf16.mxu0 0
  %388 = vmatpush1.bf16.msra.mxu0 %v378
  %389 = vmatprep.subr.bf16.mxu0 0
  %390 = vmatpush1.bf16.msra.mxu0 %v377
  %391 = vmatprep.subr.bf16.mxu0 0
  %392 = vmatpush1.bf16.msra.mxu0 %v376
  %393 = vmatprep.subr.bf16.mxu0 0
  %394 = vmatpush1.bf16.msra.mxu0 %v375
  %395 = vmatprep.subr.bf16.mxu0 0
  %396 = vmatpush1.bf16.msra.mxu0 %v374
  %397 = vmatprep.subr.bf16.mxu0 0
  %398 = vmatpush1.bf16.msra.mxu0 %v373
  %399 = vmatprep.subr.bf16.mxu0 0
  %400 = vmatpush1.bf16.msra.mxu0 %v372
  %401 = vmatprep.subr.bf16.mxu0 0
  %402 = vmatpush1.bf16.msra.mxu0 %v371
  %403 = vmatprep.subr.bf16.mxu0 0
  %404 = vmatpush2.bf16.msra.mxu0 0
  %405 = vmatprep.subr.bf16.mxu0 0
  %406 = vmatpush2.bf16.msra.mxu0 0
  %407 = vmatprep.subr.bf16.mxu0 0
  %408 = vmatpush2.bf16.msra.mxu0 0
  %409 = vmatprep.subr.bf16.mxu0 0
  %410 = vmatpush2.bf16.msra.mxu0 0
  %411 = vmatprep.subr.bf16.mxu0 0
  %412 = vmatpush2.bf16.msra.mxu0 0
  %413 = vmatprep.subr.bf16.mxu0 0
  %414 = vmatpush2.bf16.msra.mxu0 0
  %415 = vmatprep.subr.bf16.mxu0 0
  %416 = vmatpush2.bf16.msra.mxu0 0
  %417 = vmatprep.subr.bf16.mxu0 0
  %418 = vmatpush2.bf16.msra.mxu0 0
  %419 = vmatprep.mubr.bf16.mxu0 0
  %420 = vmatmul.mubr.bf16.gmra.mxu0 %v314
  %v421 = vpop.f32.mrf.mxu0
  %v422 = vadd.f32 %v337, %v421
  %v423 = vpop.f32.mrf.mxu0
  %v424 = vpop.f32.mrf.mxu0
  %v425 = vadd.f32 %v337, %v424
  %v426 = vpop.f32.mrf.mxu0
  %427 = vmatprep.mubr.bf16.mxu0 0
  %428 = vmatmul.mubr.bf16.gmra.mxu0 %v315
  %v429 = vpop.f32.mrf.mxu0
  %v430 = vadd.f32 %v337, %v429
  %v431 = vpop.f32.mrf.mxu0
  %v432 = vpop.f32.mrf.mxu0
  %v433 = vadd.f32 %v337, %v432
  %v434 = vpop.f32.mrf.mxu0
  %435 = vdwg.mxu0
  %v436 = vadd.f32 %v422, %v158
  %v437 = vadd.f32 %v425, %v161
  %v438 = vadd.f32 %v430, %v166
  %v439 = vadd.f32 %v433, %v169
  %v440 = vld [vmem:[%s1] sm:$0xf]
  %v441 = vld [vmem:[%s1 + $0x4] sm:$0xf]
  %v442 = vld [vmem:[%s1 + $0x8] sm:$0xf]
  %v443 = vld [vmem:[%s1 + $0xc] sm:$0xf]
  %v444 = vunpack.c.l.bf16 %v440
  %v445 = vunpack.c.l.bf16 %v441
  %v446 = vunpack.c.l.bf16 %v442
  %v447 = vunpack.c.l.bf16 %v443
  %v448 = vadd.f32 %v436, %v444
  %v449 = vadd.f32 %v437, %v445
  %v450 = vadd.f32 %v438, %v446
  %v451 = vadd.f32 %v439, %v447
  %452 = vadd.xlane.f32.xlu0 %v448
  %v453 = vpop.xlane.xlu0 %452
  %454 = vadd.xlane.f32.xlu0 %v449
  %v455 = vpop.xlane.xlu0 %454
  %456 = vadd.xlane.f32.xlu0 %v450
  %v457 = vpop.xlane.xlu0 %456
  %458 = vadd.xlane.f32.xlu0 %v451
  %v459 = vpop.xlane.xlu0 %458
  %v460 = vrcp.pop 128.0
  %v461 = vmul.f32 %v453, %v460
  %v462 = vmul.f32 %v455, %v460
  %v463 = vmul.f32 %v457, %v460
  %v464 = vmul.f32 %v459, %v460
  %v465 = vmul.f32 %v448, %v448
  %v466 = vmul.f32 %v449, %v449
  %v467 = vmul.f32 %v450, %v450
  %v468 = vmul.f32 %v451, %v451
  %469 = vadd.xlane.f32.xlu0 %v465
  %v470 = vpop.xlane.xlu0 %469
  %471 = vadd.xlane.f32.xlu0 %v466
  %v472 = vpop.xlane.xlu0 %471
  %473 = vadd.xlane.f32.xlu0 %v467
  %v474 = vpop.xlane.xlu0 %473
  %475 = vadd.xlane.f32.xlu0 %v468
  %v476 = vpop.xlane.xlu0 %475
  %v477 = vmul.f32 %v470, %v460
  %v478 = vmul.f32 %v472, %v460
  %v479 = vmul.f32 %v474, %v460
  %v480 = vmul.f32 %v476, %v460
  %v481 = vmul.f32 %v461, %v461
  %v482 = vmul.f32 %v462, %v462
  %v483 = vmul.f32 %v463, %v463
  %v484 = vmul.f32 %v464, %v464
  %v485 = vsub.f32 %v477, %v481
  %v486 = vsub.f32 %v478, %v482
  %v487 = vsub.f32 %v479, %v483
  %v488 = vsub.f32 %v480, %v484
  %v489 = vmax.f32 %v485, 0.0
  %v490 = vmax.f32 %v486, 0.0
  %v491 = vmax.f32 %v487, 0.0
  %v492 = vmax.f32 %v488, 0.0
  %v493 = vsub.f32 %v448, %v461
  %v494 = vsub.f32 %v449, %v462
  %v495 = vsub.f32 %v450, %v463
  %v496 = vsub.f32 %v451, %v464
  %v497 = vadd.f32 %v489, 1e-12
  %v498 = vadd.f32 %v490, 1e-12
  %v499 = vadd.f32 %v491, 1e-12
  %v500 = vadd.f32 %v492, 1e-12
  %v501 = vrsqrt.pop %v497
  %v502 = vrsqrt.pop %v498
  %v503 = vrsqrt.pop %v499
  %v504 = vrsqrt.pop %v500
  %v505 = vmul.f32 %v493, %v501
  %v506 = vmul.f32 %v494, %v502
  %v507 = vmul.f32 %v495, %v503
  %v508 = vmul.f32 %v496, %v504
  %v509 = vld [vmem:[%s8] sm:$0x1]
  %v511 = vlaneseq
  %v512 = vshrl.u32 %v511, 7
  %v513 = vsub.s32 0, %v512
  %v514 = vrot.slane %v509, %v513
  %v516 = vmul.f32 %v505, %v514
  %v517 = vmul.f32 %v506, %v514
  %v518 = vmul.f32 %v507, %v514
  %v519 = vmul.f32 %v508, %v514
  %v520 = vld [vmem:[%s9] sm:$0x1]
  %v522 = vlaneseq
  %v523 = vshrl.u32 %v522, 7
  %v524 = vsub.s32 0, %v523
  %v525 = vrot.slane %v520, %v524
  %v527 = vadd.f32 %v516, %v525
  %v528 = vadd.f32 %v517, %v525
  %v529 = vadd.f32 %v518, %v525
  %v530 = vadd.f32 %v519, %v525
  %531 = vst [vmem:[%s10] sm:$0xff] %v527
  %532 = vst [vmem:[%s10 + $0x8] sm:$0xff] %v528
  %533 = vst [vmem:[%s10 + $0x10] sm:$0xff] %v529
  %534 = vst [vmem:[%s10 + $0x18] sm:$0xff] %v530
  // Predicated region
  $region42: #{_adapter_bert_layer_impl.1} parent=0 // pred_check
    _
  $region43: #{_adapter_bert_layer_impl.1} parent=0 // pred_check_branch
    %536 = sbr.rel (0) target = $region45
  $region44: #{_adapter_bert_layer_impl.1} parent=0 // pred_region
    _
  $region45: #{_adapter_bert_layer_impl.1} parent=0 // pred_fallthru
    _
  // Predicated region
  $region46: #{_adapter_bert_layer_impl.1} parent=0 // pred_check
    _
  $region47: #{_adapter_bert_layer_impl.1} parent=0 // pred_check_branch
    %538 = sbr.rel (0) target = $region49
  $region48: #{_adapter_bert_layer_impl.1} parent=0 // pred_region
    _
  $region49: #{_adapter_bert_layer_impl.1} parent=0 // pred_fallthru
    _

</llo_original>
